<compile_context>
chip_gen: v6e
topology: v6e:2x2x1
jax: 0.10.0
libtpu: 0.0.40
codegen_flags: <defaults>
</compile_context>

<pallas_src>
import functools

import jax
import jax.numpy as jnp
from jax import lax
from jax.experimental import pallas as pl
from jax.experimental.pallas import tpu as pltpu


def _sbert_tile_kernel(x1_ref, x2_ref, lbl_ref, w_ref, b_ref, loss_ref,
                       *sim_refs, batch, tile_b, ragged, with_sim):
    eps = 1e-12  # F.normalize default eps
    f32 = jnp.float32

    # bf16 inputs: keep the wide (TB, D) elementwise passes in bf16 (2x VPU
    # throughput on v6e/v7x); reductions below accumulate in f32.  f32 inputs
    # (and therefore v5e callers) take the pure f32 path.
    cdt = jnp.bfloat16 if x1_ref.dtype == jnp.bfloat16 else f32

    x1 = x1_ref[...].astype(cdt)                  # (TB, D)
    x2 = x2_ref[...].astype(cdt)                  # (TB, D)

    if ragged:
        # Ragged final tile: zero out-of-range rows BEFORE rsqrt/exp so every
        # downstream value stays finite; the loss rows are selected with
        # jnp.where (never mask * value, which would propagate NaN).
        row = (pl.program_id(0) * tile_b
               + lax.broadcasted_iota(jnp.int32, (tile_b, 1), 0))
        valid = row < batch                       # (TB, 1) bool
        zero = jnp.zeros((), cdt)
        x1 = jnp.where(valid, x1, zero)
        x2 = jnp.where(valid, x2, zero)

    # F.normalize(x, dim=1): x / max(||x||, eps) == x * rsqrt(max(ss, eps^2))
    ss1 = jnp.sum(x1 * x1, axis=1, keepdims=True, dtype=f32)
    ss2 = jnp.sum(x2 * x2, axis=1, keepdims=True, dtype=f32)
    inv1 = lax.rsqrt(jnp.maximum(ss1, eps * eps))  # EUP
    inv2 = lax.rsqrt(jnp.maximum(ss2, eps * eps))
    n1 = x1 * inv1.astype(cdt)
    n2 = x2 * inv2.astype(cdt)

    if with_sim:
        # bmm((TB,1,D),(TB,D,1)) -> per-row dot = cosine similarity
        sim = jnp.sum(n1 * n2, axis=1, keepdims=True, dtype=f32)  # (TB, 1)
        sim_refs[0][...] = sim

    # Linear on cat([n1, n2, |n1-n2|], dim=1), weight split into 3 rows.
    w = w_ref[...].astype(cdt)                    # (3, D)
    w1 = w[0:1, :]
    w2 = w[1:2, :]
    w3 = w[2:3, :]
    bias = b_ref[0, 0]
    logit = jnp.sum(n1 * w1 + n2 * w2 + jnp.abs(n1 - n2) * w3,
                    axis=1, keepdims=True, dtype=f32) + bias  # (TB, 1)

    # out = 1 - sigmoid(logit);  loss_row = -lbl*log(out) - (1-lbl)*log(1-out)
    #   log(out)   = -softplus(logit)
    #   log(1-out) = -softplus(-logit)
    # -> loss_row = lbl*softplus(logit) + (1-lbl)*softplus(-logit)
    t = jnp.log(1.0 + jnp.exp(-jnp.abs(logit)))   # shared softplus tail
    sp_pos = jnp.maximum(logit, 0.0) + t          # softplus(logit)
    sp_neg = jnp.maximum(-logit, 0.0) + t         # softplus(-logit)

    lbl = lbl_ref[...]                            # (TB, 1), precomputed f32
    loss_rows = lbl * sp_pos + (1.0 - lbl) * sp_neg
    if ragged:
        loss_rows = jnp.where(valid, loss_rows, 0.0)
    loss_ref[0, 0] = jnp.sum(loss_rows)           # per-tile partial sum (SMEM)


def _round_up(x, m):
    return (x + m - 1) // m * m


def _vmem_capacity_bytes():
    try:
        return int(pltpu.get_tpu_info().vmem_capacity_bytes)
    except Exception:
        return 64 * 1024 * 1024  # conservative (v7x-sized) fallback


def _choose_tile_b(B, D, itemsize, vmem_cap):
    # Double-buffered x1 + x2 per tile: 2 inputs * 2 buffers * TB * D * bytes.
    # Budget ~1/6 of VMEM so inputs + the handful of live (TB, D) f32
    # intermediates stay well inside the scoped limit on every generation
    # (~10 MiB of inputs on v7x's 64 MiB, ~21 MiB on v5e/v6e's 128 MiB).
    budget = max(4 << 20, vmem_cap // 6)
    tile = budget // max(1, 2 * 2 * D * itemsize)
    tile = max(8, (tile // 8) * 8)
    tile = min(tile, 2048)                 # per-step overhead fully amortized
    b8 = _round_up(B, 8)
    tile = min(tile, b8)
    if b8 >= 16:
        # Keep at least 2 grid steps so the "parallel" axis can feed both
        # v7x TensorCores.
        tile = min(tile, _round_up(b8 // 2, 8))
    return int(max(8, tile))


def sentence_bert_loss(input1, input2, label, fc_weight, fc_bias,
                       return_sim=False):
    """input1/input2: (B, D) f32 or bf16, label: (B,), fc_weight: (1, 3D),
       fc_bias: (1,).  Returns scalar loss (and (B,) similarity)."""
    B, D = input1.shape
    itemsize = jnp.dtype(input1.dtype).itemsize
    vmem_cap = _vmem_capacity_bytes()
    tile_b = _choose_tile_b(B, D, itemsize, vmem_cap)
    n_tiles = int(pl.cdiv(B, tile_b))
    Bp = n_tiles * tile_b
    ragged = (B % tile_b) != 0

    # Hoisted label preprocessing: the batch mean couples all rows and is
    # O(B) scalar work — doing it here is what allows tiling the batch axis.
    lbl_f = label.astype(jnp.float32)
    lbl = jax.nn.sigmoid((lbl_f - jnp.mean(lbl_f)) * 100.0).reshape(B, 1)
    if Bp != B:
        # Pad only the tiny (B, 1) label column.  The big (B, D) inputs are
        # read with a ragged final tile and masked in-kernel — no HBM copies.
        lbl = jnp.pad(lbl, ((0, Bp - B), (0, 0)))

    # Torch cat order is [n1, n2, |n1-n2|] -> split the (1, 3D) weight row.
    w3d = fc_weight.reshape(3, D).astype(jnp.float32)
    bias = fc_bias.reshape(1, 1).astype(jnp.float32)

    kernel = functools.partial(_sbert_tile_kernel, batch=B, tile_b=tile_b,
                               ragged=ragged, with_sim=return_sim)

    out_shape = [jax.ShapeDtypeStruct((n_tiles, 1), jnp.float32)]
    out_specs = [pl.BlockSpec((1, 1), lambda i: (i, 0),
                              memory_space=pltpu.SMEM)]     # per-tile loss sum
    if return_sim:
        out_shape.append(jax.ShapeDtypeStruct((Bp, 1), jnp.float32))
        out_specs.append(pl.BlockSpec((tile_b, 1), lambda i: (i, 0)))

    # Working-set estimate: double-buffered inputs + f32 (TB, D) temporaries.
    inputs_db = 2 * 2 * tile_b * D * itemsize
    temporaries = 8 * tile_b * D * 4
    vmem_limit = int(min(int(vmem_cap * 0.8),
                         max(16 << 20, inputs_db + temporaries + (4 << 20))))

    cost = pl.CostEstimate(
        flops=16 * B * D,
        transcendentals=3 * B,
        bytes_accessed=2 * B * D * itemsize + 16 * B)

    outs = pl.pallas_call(
        kernel,
        out_shape=tuple(out_shape),
        grid=(n_tiles,),
        in_specs=[
            pl.BlockSpec((tile_b, D), lambda i: (i, 0)),    # input1 tile
            pl.BlockSpec((tile_b, D), lambda i: (i, 0)),    # input2 tile
            pl.BlockSpec((tile_b, 1), lambda i: (i, 0)),    # label tile
            pl.BlockSpec((3, D), lambda i: (0, 0)),         # weight (resident)
            pl.BlockSpec((1, 1), lambda i: (0, 0),
                         memory_space=pltpu.SMEM),          # bias scalar
        ],
        out_specs=tuple(out_specs),
        compiler_params=pltpu.CompilerParams(
            dimension_semantics=("parallel",),
            vmem_limit_bytes=vmem_limit),
        cost_estimate=cost,
    )(input1, input2, lbl, w3d, bias)

    loss = jnp.sum(outs[0]) / jnp.float32(B)
    if return_sim:
        return loss, outs[1][:B, 0]
    return loss


def _reference(input1, input2, label, fc_weight, fc_bias):
    # Literal transcription of the PyTorch module (for validation).
    eps = 1e-12
    x1 = input1.astype(jnp.float32)
    x2 = input2.astype(jnp.float32)
    n1 = x1 / jnp.maximum(jnp.linalg.norm(x1, axis=1, keepdims=True), eps)
    n2 = x2 / jnp.maximum(jnp.linalg.norm(x2, axis=1, keepdims=True), eps)
    sim = jnp.sum(n1 * n2, axis=1)
    cat = jnp.concatenate([n1, n2, jnp.abs(n1 - n2)], axis=1)
    out = cat @ fc_weight.reshape(-1) + fc_bias[0]
    out = 1.0 - jax.nn.sigmoid(out)
    lbl = jax.nn.sigmoid((label - jnp.mean(label)) * 100.0)
    loss = -lbl * jnp.log(out) - (1.0 - lbl) * jnp.log(1.0 - out)
    return jnp.mean(loss), sim


if __name__ == "__main__":
    B, outsz = 8, 32   # batch=8, hidden=32

    key = jax.random.PRNGKey(0)
    k1, k2, k3, k4, k5 = jax.random.split(key, 5)

    input1 = jax.random.normal(k1, (B, outsz), dtype=jnp.float32)
    input2 = jax.random.normal(k2, (B, outsz), dtype=jnp.float32)
    label = jax.random.uniform(k3, (B,), dtype=jnp.float32)

    # nn.Linear(outsz*3, 1) init: U(-1/sqrt(fan_in), 1/sqrt(fan_in))
    bound = 1.0 / jnp.sqrt(jnp.float32(outsz * 3))
    fc_weight = jax.random.uniform(k4, (1, outsz * 3), dtype=jnp.float32,
                                   minval=-bound, maxval=bound)
    fc_bias = jax.random.uniform(k5, (1,), dtype=jnp.float32,
                                 minval=-bound, maxval=bound)

    loss, sim = sentence_bert_loss(input1, input2, label,
                                   fc_weight, fc_bias, return_sim=True)
    loss_only = sentence_bert_loss(input1, input2, label, fc_weight, fc_bias)
    jax.block_until_ready((loss, sim, loss_only))

    ref_loss, ref_sim = _reference(input1, input2, label, fc_weight, fc_bias)
    assert jnp.allclose(loss, ref_loss, atol=1e-5, rtol=1e-5), (loss, ref_loss)
    assert jnp.allclose(loss_only, ref_loss, atol=1e-5, rtol=1e-5)
    assert jnp.allclose(sim, ref_sim, atol=1e-5, rtol=1e-5)

    print("KERNEL_OK")
</pallas_src>

<mosaic_0001>
module attributes {stable_mosaic.version = 11 : i64} {
  func.func @_sbert_tile_kernel(%arg0: i32, %arg1: memref<8x32xf32, #tpu.memory_space<vmem>>, %arg2: memref<8x32xf32, #tpu.memory_space<vmem>>, %arg3: memref<8x1xf32, #tpu.memory_space<vmem>>, %arg4: memref<3x32xf32, #tpu.memory_space<vmem>>, %arg5: memref<1x1xf32, #tpu.memory_space<smem>>, %arg6: memref<1x1xf32, #tpu.memory_space<smem>>, %arg7: memref<8x1xf32, #tpu.memory_space<vmem>>) attributes {dimension_semantics = [#tpu.dimension_semantics<parallel>], iteration_bounds = array<i64: 1>, scalar_prefetch = 0 : i64, scratch_operands = 0 : i64, tpu.core_type = #tpu.core_type<tc>, window_params = [{transform_indices = @transform_0, window_bounds = array<i64: 8, 32>}, {transform_indices = @transform_1, window_bounds = array<i64: 8, 32>}, {transform_indices = @transform_2, window_bounds = array<i64: 8, 1>}, {pipeline_mode = #tpu.pipeline_mode<synchronous>, transform_indices = @transform_3, window_bounds = array<i64: 3, 32>}, {transform_indices = @transform_4, window_bounds = array<i64: 1, 1>}, {transform_indices = @transform_5, window_bounds = array<i64: 1, 1>}, {transform_indices = @transform_6, window_bounds = array<i64: 8, 1>}]} {
    %c0 = arith.constant 0 : index
    %c0_0 = arith.constant 0 : index
    %0 = vector.load %arg1[%c0, %c0_0] : memref<8x32xf32, #tpu.memory_space<vmem>>, vector<8x32xf32>
    %c0_1 = arith.constant 0 : index
    %c0_2 = arith.constant 0 : index
    %1 = vector.load %arg2[%c0_1, %c0_2] : memref<8x32xf32, #tpu.memory_space<vmem>>, vector<8x32xf32>
    %2 = arith.mulf %0, %0 : vector<8x32xf32>
    %cst = arith.constant dense<0.000000e+00> : vector<8xf32>
    %3 = vector.multi_reduction <add>, %2, %cst [1] : vector<8x32xf32> to vector<8xf32>
    %4 = vector.shape_cast %3 : vector<8xf32> to vector<8x1xf32>
    %5 = arith.mulf %1, %1 : vector<8x32xf32>
    %cst_3 = arith.constant dense<0.000000e+00> : vector<8xf32>
    %6 = vector.multi_reduction <add>, %5, %cst_3 [1] : vector<8x32xf32> to vector<8xf32>
    %7 = vector.shape_cast %6 : vector<8xf32> to vector<8x1xf32>
    %cst_4 = arith.constant 1.000000e-24 : f32
    %8 = vector.broadcast %cst_4 : f32 to vector<8x1xf32>
    %9 = arith.maximumf %4, %8 : vector<8x1xf32>
    %10 = math.rsqrt %9 : vector<8x1xf32>
    %cst_5 = arith.constant 1.000000e-24 : f32
    %11 = vector.broadcast %cst_5 : f32 to vector<8x1xf32>
    %12 = arith.maximumf %7, %11 : vector<8x1xf32>
    %13 = math.rsqrt %12 : vector<8x1xf32>
    %14 = vector.broadcast %10 : vector<8x1xf32> to vector<8x32xf32>
    %15 = arith.mulf %0, %14 : vector<8x32xf32>
    %16 = vector.broadcast %13 : vector<8x1xf32> to vector<8x32xf32>
    %17 = arith.mulf %1, %16 : vector<8x32xf32>
    %18 = arith.mulf %15, %17 : vector<8x32xf32>
    %cst_6 = arith.constant dense<0.000000e+00> : vector<8xf32>
    %19 = vector.multi_reduction <add>, %18, %cst_6 [1] : vector<8x32xf32> to vector<8xf32>
    %20 = vector.shape_cast %19 : vector<8xf32> to vector<8x1xf32>
    %c0_7 = arith.constant 0 : index
    %c0_8 = arith.constant 0 : index
    %21 = vector.load %arg7[%c0_7, %c0_8] : memref<8x1xf32, #tpu.memory_space<vmem>>, vector<8x1xf32>
    tpu.vector_store %arg7[%c0_7, %c0_8], %20 {strides = array<i32>} : memref<8x1xf32, #tpu.memory_space<vmem>>, vector<8x1xf32>,
    %c0_9 = arith.constant 0 : index
    %c0_10 = arith.constant 0 : index
    %22 = vector.load %arg4[%c0_9, %c0_10] : memref<3x32xf32, #tpu.memory_space<vmem>>, vector<3x32xf32>
    %23 = vector.extract_strided_slice %22 {offsets = [0, 0], sizes = [1, 32], strides = [1, 1]} : vector<3x32xf32> to vector<1x32xf32>
    %24 = vector.extract_strided_slice %22 {offsets = [1, 0], sizes = [1, 32], strides = [1, 1]} : vector<3x32xf32> to vector<1x32xf32>
    %25 = vector.extract_strided_slice %22 {offsets = [2, 0], sizes = [1, 32], strides = [1, 1]} : vector<3x32xf32> to vector<1x32xf32>
    %c0_11 = arith.constant 0 : index
    %c0_12 = arith.constant 0 : index
    %26 = memref.load %arg5[%c0_11, %c0_12] : memref<1x1xf32, #tpu.memory_space<smem>>
    %27 = vector.broadcast %23 : vector<1x32xf32> to vector<8x32xf32>
    %28 = arith.mulf %15, %27 : vector<8x32xf32>
    %29 = vector.broadcast %24 : vector<1x32xf32> to vector<8x32xf32>
    %30 = arith.mulf %17, %29 : vector<8x32xf32>
    %31 = arith.addf %28, %30 : vector<8x32xf32>
    %32 = arith.subf %15, %17 : vector<8x32xf32>
    %33 = math.absf %32 : vector<8x32xf32>
    %34 = vector.broadcast %25 : vector<1x32xf32> to vector<8x32xf32>
    %35 = arith.mulf %33, %34 : vector<8x32xf32>
    %36 = arith.addf %31, %35 : vector<8x32xf32>
    %cst_13 = arith.constant dense<0.000000e+00> : vector<8xf32>
    %37 = vector.multi_reduction <add>, %36, %cst_13 [1] : vector<8x32xf32> to vector<8xf32>
    %38 = vector.shape_cast %37 : vector<8xf32> to vector<8x1xf32>
    %39 = vector.broadcast %26 : f32 to vector<8x1xf32>
    %40 = arith.addf %38, %39 : vector<8x1xf32>
    %41 = math.absf %40 : vector<8x1xf32>
    %cst_14 = arith.constant 0.000000e+00 : f32
    %42 = vector.broadcast %cst_14 : f32 to vector<8x1xf32>
    %43 = arith.subf %42, %41 : vector<8x1xf32>
    %44 = math.exp %43 : vector<8x1xf32>
    %cst_15 = arith.constant 1.000000e+00 : f32
    %45 = vector.broadcast %cst_15 : f32 to vector<8x1xf32>
    %46 = arith.addf %45, %44 : vector<8x1xf32>
    %47 = math.log %46 : vector<8x1xf32>
    %cst_16 = arith.constant 0.000000e+00 : f32
    %48 = vector.broadcast %cst_16 : f32 to vector<8x1xf32>
    %49 = arith.maximumf %40, %48 : vector<8x1xf32>
    %50 = arith.addf %49, %47 : vector<8x1xf32>
    %cst_17 = arith.constant 0.000000e+00 : f32
    %51 = vector.broadcast %cst_17 : f32 to vector<8x1xf32>
    %52 = arith.subf %51, %40 : vector<8x1xf32>
    %cst_18 = arith.constant 0.000000e+00 : f32
    %53 = vector.broadcast %cst_18 : f32 to vector<8x1xf32>
    %54 = arith.maximumf %52, %53 : vector<8x1xf32>
    %55 = arith.addf %54, %47 : vector<8x1xf32>
    %c0_19 = arith.constant 0 : index
    %c0_20 = arith.constant 0 : index
    %56 = vector.load %arg3[%c0_19, %c0_20] : memref<8x1xf32, #tpu.memory_space<vmem>>, vector<8x1xf32>
    %57 = arith.mulf %56, %50 : vector<8x1xf32>
    %cst_21 = arith.constant 1.000000e+00 : f32
    %58 = vector.broadcast %cst_21 : f32 to vector<8x1xf32>
    %59 = arith.subf %58, %56 : vector<8x1xf32>
    %60 = arith.mulf %59, %55 : vector<8x1xf32>
    %61 = arith.addf %57, %60 : vector<8x1xf32>
    %62 = vector.shape_cast %61 : vector<8x1xf32> to vector<1x8x1xf32>
    %cst_22 = arith.constant dense<0.000000e+00> : vector<1xf32>
    %63 = vector.multi_reduction <add>, %62, %cst_22 [1, 2] : vector<1x8x1xf32> to vector<1xf32>
    %64 = vector.shape_cast %63 : vector<1xf32> to vector<1x1x1xf32>
    %65 = vector.extract %64[0, 0, 0] : f32 from vector<1x1x1xf32>
    %c0_23 = arith.constant 0 : index
    %c0_24 = arith.constant 0 : index
    %66 = memref.load %arg6[%c0_23, %c0_24] : memref<1x1xf32, #tpu.memory_space<smem>>
    memref.store %65, %arg6[%c0_23, %c0_24] : memref<1x1xf32, #tpu.memory_space<smem>>
    return
  }
  func.func @transform_0(%arg0: i32) -> (i32, i32) {
    %c0_i32 = arith.constant 0 : i32
    %c0_i32_0 = arith.constant 0 : i32
    return %arg0, %c0_i32 : i32, i32
  }
  func.func @transform_1(%arg0: i32) -> (i32, i32) {
    %c0_i32 = arith.constant 0 : i32
    %c0_i32_0 = arith.constant 0 : i32
    return %arg0, %c0_i32 : i32, i32
  }
  func.func @transform_2(%arg0: i32) -> (i32, i32) {
    %c0_i32 = arith.constant 0 : i32
    %c0_i32_0 = arith.constant 0 : i32
    return %arg0, %c0_i32 : i32, i32
  }
  func.func @transform_3(%arg0: i32) -> (i32, i32) {
    %c0_i32 = arith.constant 0 : i32
    %c0_i32_0 = arith.constant 0 : i32
    %c0_i32_1 = arith.constant 0 : i32
    return %c0_i32, %c0_i32_0 : i32, i32
  }
  func.func @transform_4(%arg0: i32) -> (i32, i32) {
    %c0_i32 = arith.constant 0 : i32
    %c0_i32_0 = arith.constant 0 : i32
    %c0_i32_1 = arith.constant 0 : i32
    return %c0_i32, %c0_i32_0 : i32, i32
  }
  func.func @transform_5(%arg0: i32) -> (i32, i32) {
    %c0_i32 = arith.constant 0 : i32
    %c0_i32_0 = arith.constant 0 : i32
    return %arg0, %c0_i32 : i32, i32
  }
  func.func @transform_6(%arg0: i32) -> (i32, i32) {
    %c0_i32 = arith.constant 0 : i32
    %c0_i32_0 = arith.constant 0 : i32
    return %arg0, %c0_i32 : i32, i32
  }
}

</mosaic_0001>

<llo_original>
// kernel: tpu_custom_call.1
$region0: #{tpu_custom_call.1}
  #allocation0 [shape = 'u32[]', space=smem, size = 0x4, offset = 0x4, fixed_abs, tag = 'smem constant byte address 0x4 - core index']
  #allocation1 [shape = 'u32[144,128]{1,0:T(1,128)}', space=vmem, size = 0x12000, scoped, tag = 'internal scratch']
  #allocation2 [shape = 'f32[1,1]{1,0:T(1,128)S(6)}', space=smem, size = 0x200, scoped, tag = 'scoped memory for tpu_custom_call.1']
  %s0 = inlined_call_operand.vmem [shape: f32[8,32], index: 0, kind: input, shape index: {}]
  %s1 = inlined_call_operand.hbm [shape: f32[8,32], index: 1, kind: input, shape index: {}]
  %s2 = inlined_call_operand.vmem [shape: f32[8,1], index: 2, kind: input, shape index: {}]
  %s3 = inlined_call_operand.vmem [shape: f32[3,32], index: 3, kind: input, shape index: {}]
  %s4 = inlined_call_operand.<no memory space> [shape: f32[1,1], index: 4, kind: input, shape index: {}]
  %s5 = inlined_call_operand.hbm [shape: f32[1,1], index: 5, kind: output, shape index: {0}]
  %s6 = inlined_call_operand.vmem [shape: f32[8,1], index: 6, kind: output, shape index: {1}]
  %7 = xla_tuple %s5, %s6
  %s8 = sld [smem:[#allocation0]]
  $region42: #{tpu_custom_call.1} parent=0
    _
  %s10 = ssub.s32 1, %s8
  %s11 = scalar_select 0, %s10, %s8
  %12 = sst [smem:[#allocation2]] %s4
  $region1: #{tpu_custom_call.1} parent=0
    #allocation3 [shape = 'u8[4096]{0}', space=vmem, size = 0x1000, scoped, tag = 'input window, operand 1, single buffered']
    #allocation4 [shape = 's32[1]{0}', space=sflag, size = 0x4, scoped, tag = 'scoped memory for tpu_custom_call.1']
    #allocation5 [shape = 's32[1]{0}', space=sflag, size = 0x4, scoped, tag = 'scoped memory for tpu_custom_call.1']
    #allocation6 [shape = 'u8[512]{0}', space=smem, size = 0x200, scoped, tag = 'output window, operand 0, single buffered']
    %13 = vsyncpa [#allocation4], 0
    %14 = vsyncpa [#allocation5], 0
    // Predicated region
    $region2: #{tpu_custom_call.1} parent=1 // pred_check
      _
    $region3: #{tpu_custom_call.1} parent=1 // pred_check_branch
      %16 = sbr.rel (0) target = $region5
    $region4: #{tpu_custom_call.1} parent=1 // pred_region
      _
    $region5: #{tpu_custom_call.1} parent=1 // pred_fallthru
      _
    // Predicated region
    $region6: #{tpu_custom_call.1} parent=1 // pred_check
      _
    $region7: #{tpu_custom_call.1} parent=1 // pred_check_branch
      %18 = sbr.rel (0) target = $region9
    $region8: #{tpu_custom_call.1} parent=1 // pred_region
      %s20 = ssub.s32 128, 128
      %21 = vsyncadd [#allocation4], %s20
      %s23 = sshll.u32 [#allocation3], 4
      %s24 = int_to_ptr.vmem [resolvable:$true] %s23
      %26 = dma.hbm_to_vmem [thread:$0]  %s1, 128, %s24, [#allocation4]
    $region9: #{tpu_custom_call.1} parent=1 // pred_fallthru
      _
    // Predicated region
    $region10: #{tpu_custom_call.1} parent=1 // pred_check
      _
    $region11: #{tpu_custom_call.1} parent=1 // pred_check_branch
      %28 = sbr.rel (0) target = $region13
    $region12: #{tpu_custom_call.1} parent=1 // pred_region
      _
    $region13: #{tpu_custom_call.1} parent=1 // pred_fallthru
      _
    // Predicated region
    $region14: #{tpu_custom_call.1} parent=1 // pred_check
      _
    $region15: #{tpu_custom_call.1} parent=1 // pred_check_branch
      %30 = sbr.rel (0) target = $region17
    $region16: #{tpu_custom_call.1} parent=1 // pred_region
      _
    $region17: #{tpu_custom_call.1} parent=1 // pred_fallthru
      _
    // Predicated region
    $region18: #{tpu_custom_call.1} parent=1 // pred_check
      _
    $region19: #{tpu_custom_call.1} parent=1 // pred_check_branch
      %32 = sbr.rel (0) target = $region21
    $region20: #{tpu_custom_call.1} parent=1 // pred_region
      _
    $region21: #{tpu_custom_call.1} parent=1 // pred_fallthru
      _
    // Predicated region
    $region22: #{tpu_custom_call.1} parent=1 // pred_check
      _
    $region23: #{tpu_custom_call.1} parent=1 // pred_check_branch
      %34 = sbr.rel (0) target = $region25
    $region24: #{tpu_custom_call.1} parent=1 // pred_region
      %35 = dma.done [#allocation4], 128
    $region25: #{tpu_custom_call.1} parent=1 // pred_fallthru
      _
    %v36 = vld [vmem:[%s0] sm:$0xff]
    %v37 = vld [vmem:[#allocation3] sm:$0xff]
    %v38 = vmul.f32 %v36, %v36
    %vm39 = vcmask 261120
    %v40 = vsel %vm39, %v38, 0.0
    %41 = vadd.xlane.f32.xlu0 %v40
    %v42 = vpop.xlane.xlu0 %41
    %v43 = vmul.f32 %v37, %v37
    %v44 = vsel %vm39, %v43, 0.0
    %45 = vadd.xlane.f32.xlu0 %v44
    %v46 = vpop.xlane.xlu0 %45
    %v47 = vmax.f32 %v42, 1e-24
    %v48 = vrsqrt.pop %v47
    %v49 = vmax.f32 %v46, 1e-24
    %v50 = vrsqrt.pop %v49
    %v51 = vmul.f32 %v36, %v48
    %v52 = vmul.f32 %v37, %v50
    %v53 = vmul.f32 %v51, %v52
    %v54 = vsel %vm39, %v53, 0.0
    %55 = vadd.xlane.f32.xlu0 %v54
    %v56 = vpop.xlane.xlu0 %55
    %vm57 = vcmask 7168
    %58 = vst.msk [vmem:[%s6] sm:$0xff] %vm57, %v56
    %v59 = vld [vmem:[%s3] sm:$0x7]
    %s60 = sld [smem:[#allocation2]]
    %v61 = vlaneseq
    %v62 = vshrl.u32 %v61, 7
    %v63 = vsub.s32 0, %v62
    %v64 = vrot.slane %v59, %v63
    %v65 = vmul.f32 %v51, %v64
    %v66 = vlaneseq
    %v67 = vshrl.u32 %v66, 7
    %v68 = vsub.s32 1, %v67
    %v69 = vrot.slane %v59, %v68
    %v70 = vmul.f32 %v52, %v69
    %v71 = vadd.f32 %v65, %v70
    %v72 = vsub.f32 %v51, %v52
    %v73 = vand.u32 2147483647, %v72
    %v74 = vlaneseq
    %v75 = vshrl.u32 %v74, 7
    %v76 = vsub.s32 2, %v75
    %v77 = vrot.slane %v59, %v76
    %v78 = vmul.f32 %v73, %v77
    %v79 = vadd.f32 %v71, %v78
    %v80 = vsel %vm39, %v79, 0.0
    %81 = vadd.xlane.f32.xlu0 %v80
    %v82 = vpop.xlane.xlu0 %81
    %v83 = vstv %s60
    %v84 = vadd.f32 %v82, %v83
    %v85 = vand.u32 2147483647, %v84
    %v86 = vsub.f32 0.0, %v85
    %v87 = vmul.f32 %v86, 1.442695
    %v88 = vpow.pop %v87
    %v89 = vadd.f32 %v88, 1.0
    %v90 = vlog2.pop %v89
    %v91 = vmul.f32 %v90, 0.6931472
    %v92 = vmax.f32 %v84, 0.0
    %v93 = vadd.f32 %v92, %v91
    %v94 = vsub.f32 0.0, %v84
    %v95 = vmax.f32 %v94, 0.0
    %v96 = vadd.f32 %v95, %v91
    %v97 = vld [vmem:[%s2] sm:$0xff]
    %v98 = vmul.f32 %v97, %v93
    %v99 = vsub.f32 1.0, %v97
    %v100 = vmul.f32 %v99, %v96
    %v101 = vadd.f32 %v98, %v100
    %v102 = vsel %vm57, %v101, 0.0
    %103 = vadd.xlane.f32.xlu0 %v102
    %v104 = vpop.xlane.xlu0 %103
    %v105 = vrot.slane %v104, 4
    %v106 = vadd.f32 %v104, %v105
    %v107 = vrot.slane %v106, 2
    %v108 = vadd.f32 %v106, %v107
    %v109 = vrot.slane %v108, 1
    %v110 = vadd.f32 %v108, %v109
    %s111 = vtos %v110
    %s112 = scalar_lea.smem [#allocation6], 0
    %113 = sst [smem:[%s112]] %s111
    // Predicated region
    $region26: #{tpu_custom_call.1} parent=1 // pred_check
      _
    $region27: #{tpu_custom_call.1} parent=1 // pred_check_branch
      %115 = sbr.rel (0) target = $region29
    $region28: #{tpu_custom_call.1} parent=1 // pred_region
      %s117 = ssub.s32 16, 16
      %118 = vsyncadd [#allocation5], %s117
      %121 = dma.smem_to_hbm [#allocation6], 16, %s5, [#allocation5]
    $region29: #{tpu_custom_call.1} parent=1 // pred_fallthru
      _
    // Predicated region
    $region30: #{tpu_custom_call.1} parent=1 // pred_check
      _
    $region31: #{tpu_custom_call.1} parent=1 // pred_check_branch
      %123 = sbr.rel (0) target = $region33
    $region32: #{tpu_custom_call.1} parent=1 // pred_region
      _
    $region33: #{tpu_custom_call.1} parent=1 // pred_fallthru
      _
    // Predicated region
    $region34: #{tpu_custom_call.1} parent=1 // pred_check
      _
    $region35: #{tpu_custom_call.1} parent=1 // pred_check_branch
      %125 = sbr.rel (0) target = $region37
    $region36: #{tpu_custom_call.1} parent=1 // pred_region
      %126 = dma.done [#allocation5], 16
    $region37: #{tpu_custom_call.1} parent=1 // pred_fallthru
      _
    // Predicated region
    $region38: #{tpu_custom_call.1} parent=1 // pred_check
      _
    $region39: #{tpu_custom_call.1} parent=1 // pred_check_branch
      %128 = sbr.rel (0) target = $region41
    $region40: #{tpu_custom_call.1} parent=1 // pred_region
      _
    $region41: #{tpu_custom_call.1} parent=1 // pred_fallthru
      _
    %129 = sfence
    %130 = vsyncpa [#allocation4], 1
    %131 = vsyncpa [#allocation5], 1

</llo_original>
